<compile_context>
chip_gen: v6e
topology: v6e:2x2x1
jax: 0.10.0
libtpu: 0.0.40
codegen_flags: <defaults>
</compile_context>

<pallas_src>
import functools

import jax
import jax.numpy as jnp
from jax.experimental import pallas as pl
from jax.experimental.pallas import tpu as pltpu

MIN_LOG_STD = -20.0
MAX_LOG_STD = 2.0
INIT_W = 0.003

_LANES = 128            # TPU lane width: head output is padded to a multiple of this
_MAX_BATCH_BLOCK = 512  # rows per grid step (amortizes ~0.35us/step overhead)
_SINGLE_STEP_MAX_B = 128  # below this, a single grid step (launch-overhead bound)


def _round_up(x, m):
    return ((x + m - 1) // m) * m


def _actor_kernel(x_ref, w1_ref, b1_ref, w2_ref, b2_ref, wh_ref, bh_ref, out_ref, *,
                  action_dim, matmul_dtype):
    """Whole 3-layer actor MLP on one batch tile; weights stay resident."""

    def mm(a, w_ref):
        # Cast dot operands to the (possibly bf16) matmul dtype; accumulate f32.
        return jnp.dot(a.astype(matmul_dtype), w_ref[...].astype(matmul_dtype),
                       preferred_element_type=jnp.float32)

    x = x_ref[...]

    # fc1 + ReLU
    h1 = jnp.maximum(mm(x, w1_ref) + b1_ref[...], 0.0)

    # fc2 + ReLU
    h2 = jnp.maximum(mm(h1, w2_ref) + b2_ref[...], 0.0)

    # Fused mu|sigma head: wh is (H, Apad) = [w_mu | w_sigma | zero-pad],
    # bh is (1, Apad).  One lane-dense matmul for both heads.
    head = mm(h2, wh_ref) + bh_ref[...]

    # Clamp only the sigma lanes [A, 2A); mu lanes and zero-padded lanes pass
    # through untouched.  Runs on VPU slots with slack under the MXU.
    col = jax.lax.broadcasted_iota(jnp.int32, head.shape, 1)
    sigma_lane = (col >= action_dim) & (col < 2 * action_dim)
    head = jnp.where(sigma_lane, jnp.clip(head, MIN_LOG_STD, MAX_LOG_STD), head)

    out_ref[...] = head.astype(out_ref.dtype)


@functools.partial(jax.jit, static_argnames=("action_dim",))
def stochastic_actor_forward(state, params, *, action_dim):
    """SAC actor forward pass in a single Pallas TPU kernel.

    Args:
      state:  (B, state_dim) float32
      params: dict with packed layout (see init_params):
        w1      (S, H)        fc1 weight
        b1      (1, H)        fc1 bias (f32)
        w2      (H, H)        fc2 weight
        b2      (1, H)        fc2 bias (f32)
        w_head  (H, Apad)     [w_mu | w_sigma | 0-pad], Apad = round_up(2A, 128)
        b_head  (1, Apad)     [b_mu | b_sigma | 0-pad] (f32)
      action_dim: static int A.
    Returns:
      (mu, log_sigma): each (B, action_dim) float32.
    """
    B, S = state.shape
    H = params["w1"].shape[1]
    Ap = params["w_head"].shape[1]           # lane-dense head width (multiple of 128)
    A = action_dim

    # Batch tiling: single grid step for small B (overhead-bound); otherwise
    # at least 2 steps (so "parallel" actually shards across v7x's two TCs),
    # capped at _MAX_BATCH_BLOCK rows, and a multiple of 8 sublanes.
    if B <= _SINGLE_STEP_MAX_B:
        block_b = B
    else:
        block_b = min(_MAX_BATCH_BLOCK, _round_up(pl.cdiv(B, 2), 8))
    n_blocks = pl.cdiv(B, block_b)

    # bf16 MXU operands once H is nontrivial (or if weights were stored bf16);
    # biases / ReLU / clamp stay f32.
    matmul_dtype = (jnp.bfloat16
                    if (H >= 256 or params["w1"].dtype == jnp.bfloat16)
                    else jnp.float32)

    kernel = functools.partial(_actor_kernel, action_dim=A, matmul_dtype=matmul_dtype)

    # Resident weights: constant index_map -> single-buffer them when the grid
    # has more than one step (halves weight VMEM; zero DMA cost since the
    # block index never changes).
    resident = {"pipeline_mode": pl.Buffered(1)} if n_blocks > 1 else {}

    in_specs = [
        pl.BlockSpec((block_b, S), lambda i: (i, 0)),            # state: batch-tiled
        pl.BlockSpec((S, H), lambda i: (0, 0), **resident),       # w1
        pl.BlockSpec((1, H), lambda i: (0, 0), **resident),       # b1
        pl.BlockSpec((H, H), lambda i: (0, 0), **resident),       # w2
        pl.BlockSpec((1, H), lambda i: (0, 0), **resident),       # b2
        pl.BlockSpec((H, Ap), lambda i: (0, 0), **resident),      # w_head
        pl.BlockSpec((1, Ap), lambda i: (0, 0), **resident),      # b_head
    ]
    out_specs = pl.BlockSpec((block_b, Ap), lambda i: (i, 0))

    # Advisory cost estimate: true work (batch B, weights counted once).
    w_itemsize = jnp.dtype(params["w1"].dtype).itemsize
    weight_bytes = (S * H + H * H + H * Ap) * w_itemsize + (2 * H + Ap) * 4
    flops = 2 * B * (S * H + H * H + H * Ap)
    bytes_accessed = B * (S + Ap) * 4 + weight_bytes

    # Only raise the scoped-VMEM limit when we'd actually exceed the most
    # conservative default (~16 MiB on v5e; 32 MiB on v6e/v7x).  On v7x
    # (64 MiB physical) bf16 weights are the real fix for very large H.
    weight_bufs = 1 if n_blocks > 1 else 2
    vmem_est = (weight_bufs * weight_bytes
                + 2 * block_b * (S + Ap) * 4     # double-buffered in/out tiles
                + 2 * block_b * H * 4)           # h1/h2 intermediates (rough)
    compiler_kwargs = {"dimension_semantics": ("parallel",)}
    if vmem_est > (16 << 20):
        compiler_kwargs["vmem_limit_bytes"] = min(int(vmem_est * 5 // 4), 100 << 20)

    head = pl.pallas_call(
        kernel,
        out_shape=jax.ShapeDtypeStruct((B, Ap), jnp.float32),
        grid=(n_blocks,),
        in_specs=in_specs,
        out_specs=out_specs,
        compiler_params=pltpu.CompilerParams(**compiler_kwargs),
        cost_estimate=pl.CostEstimate(
            flops=flops, transcendentals=0, bytes_accessed=bytes_accessed),
    )(state, params["w1"], params["b1"], params["w2"], params["b2"],
      params["w_head"], params["b_head"])

    mu = head[:, :A]
    log_sigma = head[:, A:2 * A]
    return mu, log_sigma


def init_params(key, state_dim, action_dim, hidden_dim, weight_dtype=jnp.float32):
    """Deterministic init matching the module's shapes/init, in packed layout."""
    ks = jax.random.split(key, 8)

    def uniform(k, shape, bound):
        return jax.random.uniform(k, shape, jnp.float32, -bound, bound)

    # fc1/fc2: PyTorch default Linear init U(-1/sqrt(fan_in), 1/sqrt(fan_in)).
    b1_bound = 1.0 / float(state_dim) ** 0.5
    b2_bound = 1.0 / float(hidden_dim) ** 0.5

    w1 = uniform(ks[0], (state_dim, hidden_dim), b1_bound)
    b1 = uniform(ks[1], (1, hidden_dim), b1_bound)
    w2 = uniform(ks[2], (hidden_dim, hidden_dim), b2_bound)
    b2 = uniform(ks[3], (1, hidden_dim), b2_bound)
    # mu / sigma heads: U(-init_w, init_w) as in the module.
    w_mu = uniform(ks[4], (hidden_dim, action_dim), INIT_W)
    b_mu = uniform(ks[5], (1, action_dim), INIT_W)
    w_sigma = uniform(ks[6], (hidden_dim, action_dim), INIT_W)
    b_sigma = uniform(ks[7], (1, action_dim), INIT_W)

    # Fused, lane-dense head: zero-pad [w_mu|w_sigma] / [b_mu|b_sigma] from
    # 2A lanes up to a multiple of 128 so the kernel output block is
    # full-lane-width (unmasked stores, dense writeback DMA).
    a2 = 2 * action_dim
    a_pad = _round_up(a2, _LANES)
    w_head = jnp.pad(jnp.concatenate([w_mu, w_sigma], axis=1), ((0, 0), (0, a_pad - a2)))
    b_head = jnp.pad(jnp.concatenate([b_mu, b_sigma], axis=1), ((0, 0), (0, a_pad - a2)))

    return {
        "w1": w1.astype(weight_dtype),
        "b1": b1,                              # biases kept f32
        "w2": w2.astype(weight_dtype),
        "b2": b2,
        "w_head": w_head.astype(weight_dtype),
        "b_head": b_head,
    }


def reference_forward(state, params, action_dim):
    """Pure-JAX reference (unpacks the padded head)."""
    A = action_dim
    w1 = params["w1"].astype(jnp.float32)
    w2 = params["w2"].astype(jnp.float32)
    wh = params["w_head"].astype(jnp.float32)[:, :2 * A]
    bh = params["b_head"][:, :2 * A]

    h1 = jnp.maximum(state @ w1 + params["b1"], 0.0)
    h2 = jnp.maximum(h1 @ w2 + params["b2"], 0.0)
    head = h2 @ wh + bh
    mu = head[:, :A]
    log_sigma = jnp.clip(head[:, A:], MIN_LOG_STD, MAX_LOG_STD)
    return mu, log_sigma


if __name__ == "__main__":
    batch = 2
    state_dim = 16
    action_dim = 4
    hidden_dim = 32

    key = jax.random.PRNGKey(0)
    k_state, k_params = jax.random.split(key)

    state = jax.random.normal(k_state, (batch, state_dim), jnp.float32)
    params = init_params(k_params, state_dim, action_dim, hidden_dim)

    mu, log_sigma = stochastic_actor_forward(state, params, action_dim=action_dim)
    jax.block_until_ready((mu, log_sigma))

    mu_ref, ls_ref = reference_forward(state, params, action_dim)
    assert mu.shape == (batch, action_dim)
    assert log_sigma.shape == (batch, action_dim)
    assert jnp.allclose(mu, mu_ref, atol=1e-5, rtol=1e-5)
    assert jnp.allclose(log_sigma, ls_ref, atol=1e-5, rtol=1e-5)

    print("KERNEL_OK")
</pallas_src>

<mosaic_0001>
module attributes {stable_mosaic.version = 11 : i64} {
  func.func @_actor_kernel(%arg0: i32, %arg1: memref<2x16xf32, #tpu.memory_space<vmem>>, %arg2: memref<16x32xf32, #tpu.memory_space<vmem>>, %arg3: memref<1x32xf32, #tpu.memory_space<vmem>>, %arg4: memref<32x32xf32, #tpu.memory_space<vmem>>, %arg5: memref<1x32xf32, #tpu.memory_space<vmem>>, %arg6: memref<32x128xf32, #tpu.memory_space<vmem>>, %arg7: memref<1x128xf32, #tpu.memory_space<vmem>>, %arg8: memref<2x128xf32, #tpu.memory_space<vmem>>) attributes {dimension_semantics = [#tpu.dimension_semantics<parallel>], iteration_bounds = array<i64: 1>, scalar_prefetch = 0 : i64, scratch_operands = 0 : i64, tpu.core_type = #tpu.core_type<tc>, window_params = [{transform_indices = @transform_0, window_bounds = array<i64: 2, 16>}, {pipeline_mode = #tpu.pipeline_mode<synchronous>, transform_indices = @transform_1, window_bounds = array<i64: 16, 32>}, {pipeline_mode = #tpu.pipeline_mode<synchronous>, transform_indices = @transform_2, window_bounds = array<i64: 1, 32>}, {pipeline_mode = #tpu.pipeline_mode<synchronous>, transform_indices = @transform_3, window_bounds = array<i64: 32, 32>}, {pipeline_mode = #tpu.pipeline_mode<synchronous>, transform_indices = @transform_4, window_bounds = array<i64: 1, 32>}, {pipeline_mode = #tpu.pipeline_mode<synchronous>, transform_indices = @transform_5, window_bounds = array<i64: 32, 128>}, {pipeline_mode = #tpu.pipeline_mode<synchronous>, transform_indices = @transform_6, window_bounds = array<i64: 1, 128>}, {transform_indices = @transform_7, window_bounds = array<i64: 2, 128>}]} {
    %c0 = arith.constant 0 : index
    %c0_0 = arith.constant 0 : index
    %0 = vector.load %arg1[%c0, %c0_0] : memref<2x16xf32, #tpu.memory_space<vmem>>, vector<2x16xf32>
    %c0_1 = arith.constant 0 : index
    %c0_2 = arith.constant 0 : index
    %1 = vector.load %arg2[%c0_1, %c0_2] : memref<16x32xf32, #tpu.memory_space<vmem>>, vector<16x32xf32>
    %cst = arith.constant dense<0.000000e+00> : vector<2x32xf32>
    %2 = tpu.matmul %0, %1, %cst {dimension_numbers = #tpu.dot_dimension_numbers<[1], [0], [0], [1], [0, 0, 1, 1], [], []>} : vector<2x16xf32>, vector<16x32xf32>, vector<2x32xf32> -> vector<2x32xf32>
    %c0_3 = arith.constant 0 : index
    %c0_4 = arith.constant 0 : index
    %3 = vector.load %arg3[%c0_3, %c0_4] : memref<1x32xf32, #tpu.memory_space<vmem>>, vector<1x32xf32>
    %4 = vector.broadcast %3 : vector<1x32xf32> to vector<2x32xf32>
    %5 = arith.addf %2, %4 : vector<2x32xf32>
    %cst_5 = arith.constant 0.000000e+00 : f32
    %6 = vector.broadcast %cst_5 : f32 to vector<2x32xf32>
    %7 = arith.maximumf %5, %6 : vector<2x32xf32>
    %c0_6 = arith.constant 0 : index
    %c0_7 = arith.constant 0 : index
    %8 = vector.load %arg4[%c0_6, %c0_7] : memref<32x32xf32, #tpu.memory_space<vmem>>, vector<32x32xf32>
    %cst_8 = arith.constant dense<0.000000e+00> : vector<2x32xf32>
    %9 = tpu.matmul %7, %8, %cst_8 {dimension_numbers = #tpu.dot_dimension_numbers<[1], [0], [0], [1], [0, 0, 1, 1], [], []>} : vector<2x32xf32>, vector<32x32xf32>, vector<2x32xf32> -> vector<2x32xf32>
    %c0_9 = arith.constant 0 : index
    %c0_10 = arith.constant 0 : index
    %10 = vector.load %arg5[%c0_9, %c0_10] : memref<1x32xf32, #tpu.memory_space<vmem>>, vector<1x32xf32>
    %11 = vector.broadcast %10 : vector<1x32xf32> to vector<2x32xf32>
    %12 = arith.addf %9, %11 : vector<2x32xf32>
    %cst_11 = arith.constant 0.000000e+00 : f32
    %13 = vector.broadcast %cst_11 : f32 to vector<2x32xf32>
    %14 = arith.maximumf %12, %13 : vector<2x32xf32>
    %c0_12 = arith.constant 0 : index
    %c0_13 = arith.constant 0 : index
    %15 = vector.load %arg6[%c0_12, %c0_13] : memref<32x128xf32, #tpu.memory_space<vmem>>, vector<32x128xf32>
    %cst_14 = arith.constant dense<0.000000e+00> : vector<2x128xf32>
    %16 = tpu.matmul %14, %15, %cst_14 {dimension_numbers = #tpu.dot_dimension_numbers<[1], [0], [0], [1], [0, 0, 1, 1], [], []>} : vector<2x32xf32>, vector<32x128xf32>, vector<2x128xf32> -> vector<2x128xf32>
    %c0_15 = arith.constant 0 : index
    %c0_16 = arith.constant 0 : index
    %17 = vector.load %arg7[%c0_15, %c0_16] : memref<1x128xf32, #tpu.memory_space<vmem>>, vector<1x128xf32>
    %18 = vector.broadcast %17 : vector<1x128xf32> to vector<2x128xf32>
    %19 = arith.addf %16, %18 : vector<2x128xf32>
    %20 = tpu.iota {dimensions = array<i32: 1>} : vector<2x128xi32>
    %c4_i32 = arith.constant 4 : i32
    %21 = vector.broadcast %c4_i32 : i32 to vector<2x128xi32>
    %22 = arith.cmpi sge, %20, %21 : vector<2x128xi32>
    %c8_i32 = arith.constant 8 : i32
    %23 = vector.broadcast %c8_i32 : i32 to vector<2x128xi32>
    %24 = arith.cmpi slt, %20, %23 : vector<2x128xi32>
    %25 = arith.andi %22, %24 : vector<2x128xi1>
    %cst_17 = arith.constant -2.000000e+01 : f32
    %cst_18 = arith.constant 2.000000e+00 : f32
    %26 = vector.broadcast %cst_17 : f32 to vector<2x128xf32>
    %27 = arith.maximumf %26, %19 : vector<2x128xf32>
    %28 = vector.broadcast %cst_18 : f32 to vector<2x128xf32>
    %29 = arith.minimumf %28, %27 : vector<2x128xf32>
    %30 = arith.select %25, %29, %19 : vector<2x128xi1>, vector<2x128xf32>
    %c0_19 = arith.constant 0 : index
    %c0_20 = arith.constant 0 : index
    %31 = vector.load %arg8[%c0_19, %c0_20] : memref<2x128xf32, #tpu.memory_space<vmem>>, vector<2x128xf32>
    tpu.vector_store %arg8[%c0_19, %c0_20], %30 {strides = array<i32>} : memref<2x128xf32, #tpu.memory_space<vmem>>, vector<2x128xf32>,
    return
  }
  func.func @transform_0(%arg0: i32) -> (i32, i32) {
    %c0_i32 = arith.constant 0 : i32
    %c0_i32_0 = arith.constant 0 : i32
    return %arg0, %c0_i32 : i32, i32
  }
  func.func @transform_1(%arg0: i32) -> (i32, i32) {
    %c0_i32 = arith.constant 0 : i32
    %c0_i32_0 = arith.constant 0 : i32
    %c0_i32_1 = arith.constant 0 : i32
    return %c0_i32, %c0_i32_0 : i32, i32
  }
  func.func @transform_2(%arg0: i32) -> (i32, i32) {
    %c0_i32 = arith.constant 0 : i32
    %c0_i32_0 = arith.constant 0 : i32
    %c0_i32_1 = arith.constant 0 : i32
    return %c0_i32, %c0_i32_0 : i32, i32
  }
  func.func @transform_3(%arg0: i32) -> (i32, i32) {
    %c0_i32 = arith.constant 0 : i32
    %c0_i32_0 = arith.constant 0 : i32
    %c0_i32_1 = arith.constant 0 : i32
    return %c0_i32, %c0_i32_0 : i32, i32
  }
  func.func @transform_4(%arg0: i32) -> (i32, i32) {
    %c0_i32 = arith.constant 0 : i32
    %c0_i32_0 = arith.constant 0 : i32
    %c0_i32_1 = arith.constant 0 : i32
    return %c0_i32, %c0_i32_0 : i32, i32
  }
  func.func @transform_5(%arg0: i32) -> (i32, i32) {
    %c0_i32 = arith.constant 0 : i32
    %c0_i32_0 = arith.constant 0 : i32
    %c0_i32_1 = arith.constant 0 : i32
    return %c0_i32, %c0_i32_0 : i32, i32
  }
  func.func @transform_6(%arg0: i32) -> (i32, i32) {
    %c0_i32 = arith.constant 0 : i32
    %c0_i32_0 = arith.constant 0 : i32
    %c0_i32_1 = arith.constant 0 : i32
    return %c0_i32, %c0_i32_0 : i32, i32
  }
  func.func @transform_7(%arg0: i32) -> (i32, i32) {
    %c0_i32 = arith.constant 0 : i32
    %c0_i32_0 = arith.constant 0 : i32
    return %arg0, %c0_i32 : i32, i32
  }
}

</mosaic_0001>

<llo_original>
// kernel: stochastic_actor_forward.1
$region0: #{stochastic_actor_forward.1}
  #allocation0 [shape = 'u32[]', space=smem, size = 0x4, offset = 0x4, fixed_abs, tag = 'smem constant byte address 0x4 - core index']
  #allocation1 [shape = 'u32[144,128]{1,0:T(1,128)}', space=vmem, size = 0x12000, scoped, tag = 'internal scratch']
  %s0 = inlined_call_operand.hbm [shape: f32[2,16], index: 0, kind: input, shape index: {}]
  %s1 = inlined_call_operand.hbm [shape: f32[16,32], index: 1, kind: input, shape index: {}]
  %s2 = inlined_call_operand.vmem [shape: f32[1,32], index: 2, kind: input, shape index: {}]
  %s3 = inlined_call_operand.hbm [shape: f32[32,32], index: 3, kind: input, shape index: {}]
  %s4 = inlined_call_operand.vmem [shape: f32[1,32], index: 4, kind: input, shape index: {}]
  %s5 = inlined_call_operand.hbm [shape: f32[32,128], index: 5, kind: input, shape index: {}]
  %s6 = inlined_call_operand.vmem [shape: f32[1,128], index: 6, kind: input, shape index: {}]
  %s7 = inlined_call_operand.vmem [shape: f32[2,128], index: 7, kind: output, shape index: {}]
  %s8 = sld [smem:[#allocation0]]
  $region54: #{stochastic_actor_forward.1} parent=0
    _
  %s10 = ssub.s32 1, %s8
  %s11 = scalar_select 0, %s10, %s8
  $region1: #{stochastic_actor_forward.1} parent=0
    #allocation2 [shape = 'u8[1024]{0}', space=vmem, size = 0x400, scoped, tag = 'input window, operand 0, single buffered']
    #allocation3 [shape = 's32[1]{0}', space=sflag, size = 0x4, scoped, tag = 'scoped memory for stochastic_actor_forward.1']
    #allocation4 [shape = 'u8[8192]{0}', space=vmem, size = 0x2000, scoped, tag = 'input window, operand 1, single buffered']
    #allocation5 [shape = 's32[1]{0}', space=sflag, size = 0x4, scoped, tag = 'scoped memory for stochastic_actor_forward.1']
    #allocation6 [shape = 'u8[16384]{0}', space=vmem, size = 0x4000, scoped, tag = 'input window, operand 3, single buffered']
    #allocation7 [shape = 'u8[16384]{0}', space=vmem, size = 0x4000, scoped, tag = 'input window, operand 5, single buffered']
    #allocation8 [shape = 's32[1]{0}', space=sflag, size = 0x4, scoped, tag = 'scoped memory for stochastic_actor_forward.1']
    %12 = vsyncpa [#allocation3], 0
    %13 = vsyncpa [#allocation5], 0
    %14 = vsyncpa [#allocation8], 0
    // Predicated region
    $region2: #{stochastic_actor_forward.1} parent=1 // pred_check
      _
    $region3: #{stochastic_actor_forward.1} parent=1 // pred_check_branch
      %16 = sbr.rel (0) target = $region5
    $region4: #{stochastic_actor_forward.1} parent=1 // pred_region
      %s18 = ssub.s32 32, 32
      %19 = vsyncadd [#allocation3], %s18
      %s21 = sshll.u32 [#allocation2], 4
      %s22 = int_to_ptr.vmem [resolvable:$true] %s21
      %24 = dma.hbm_to_vmem [thread:$0]  %s0, 32, %s22, [#allocation3]
    $region5: #{stochastic_actor_forward.1} parent=1 // pred_fallthru
      _
    // Predicated region
    $region6: #{stochastic_actor_forward.1} parent=1 // pred_check
      _
    $region7: #{stochastic_actor_forward.1} parent=1 // pred_check_branch
      %26 = sbr.rel (0) target = $region9
    $region8: #{stochastic_actor_forward.1} parent=1 // pred_region
      %s28 = ssub.s32 256, 256
      %29 = vsyncadd [#allocation5], %s28
      %s30 = sshll.u32 [#allocation4], 4
      %s31 = int_to_ptr.vmem [resolvable:$true] %s30
      %36 = dma.hbm_to_vmem [thread:$0]  %s1, 256, %s31, [#allocation5], 128, 128, 8
    $region9: #{stochastic_actor_forward.1} parent=1 // pred_fallthru
      _
    // Predicated region
    $region10: #{stochastic_actor_forward.1} parent=1 // pred_check
      _
    $region11: #{stochastic_actor_forward.1} parent=1 // pred_check_branch
      %38 = sbr.rel (0) target = $region13
    $region12: #{stochastic_actor_forward.1} parent=1 // pred_region
      _
    $region13: #{stochastic_actor_forward.1} parent=1 // pred_fallthru
      _
    // Predicated region
    $region14: #{stochastic_actor_forward.1} parent=1 // pred_check
      _
    $region15: #{stochastic_actor_forward.1} parent=1 // pred_check_branch
      %40 = sbr.rel (0) target = $region17
    $region16: #{stochastic_actor_forward.1} parent=1 // pred_region
      %s42 = ssub.s32 512, 512
      %43 = vsyncadd [#allocation5], %s42
      %s44 = sshll.u32 [#allocation6], 4
      %s45 = int_to_ptr.vmem [resolvable:$true] %s44
      %50 = dma.hbm_to_vmem [thread:$0]  %s3, 512, %s45, [#allocation5], 128, 128, 8
    $region17: #{stochastic_actor_forward.1} parent=1 // pred_fallthru
      _
    // Predicated region
    $region18: #{stochastic_actor_forward.1} parent=1 // pred_check
      _
    $region19: #{stochastic_actor_forward.1} parent=1 // pred_check_branch
      %52 = sbr.rel (0) target = $region21
    $region20: #{stochastic_actor_forward.1} parent=1 // pred_region
      _
    $region21: #{stochastic_actor_forward.1} parent=1 // pred_fallthru
      _
    // Predicated region
    $region22: #{stochastic_actor_forward.1} parent=1 // pred_check
      _
    $region23: #{stochastic_actor_forward.1} parent=1 // pred_check_branch
      %54 = sbr.rel (0) target = $region25
    $region24: #{stochastic_actor_forward.1} parent=1 // pred_region
      %s56 = ssub.s32 512, 512
      %57 = vsyncadd [#allocation8], %s56
      %s58 = sshll.u32 [#allocation7], 4
      %s59 = int_to_ptr.vmem [resolvable:$true] %s58
      %64 = dma.hbm_to_vmem [thread:$0]  %s5, 512, %s59, [#allocation8], 128, 128, 8
    $region25: #{stochastic_actor_forward.1} parent=1 // pred_fallthru
      _
    // Predicated region
    $region26: #{stochastic_actor_forward.1} parent=1 // pred_check
      _
    $region27: #{stochastic_actor_forward.1} parent=1 // pred_check_branch
      %66 = sbr.rel (0) target = $region29
    $region28: #{stochastic_actor_forward.1} parent=1 // pred_region
      _
    $region29: #{stochastic_actor_forward.1} parent=1 // pred_fallthru
      _
    // Predicated region
    $region30: #{stochastic_actor_forward.1} parent=1 // pred_check
      _
    $region31: #{stochastic_actor_forward.1} parent=1 // pred_check_branch
      %68 = sbr.rel (0) target = $region33
    $region32: #{stochastic_actor_forward.1} parent=1 // pred_region
      %69 = dma.done [#allocation3], 32
    $region33: #{stochastic_actor_forward.1} parent=1 // pred_fallthru
      _
    // Predicated region
    $region34: #{stochastic_actor_forward.1} parent=1 // pred_check
      _
    $region35: #{stochastic_actor_forward.1} parent=1 // pred_check_branch
      %71 = sbr.rel (0) target = $region37
    $region36: #{stochastic_actor_forward.1} parent=1 // pred_region
      %72 = dma.done [#allocation5], 256
    $region37: #{stochastic_actor_forward.1} parent=1 // pred_fallthru
      _
    // Predicated region
    $region38: #{stochastic_actor_forward.1} parent=1 // pred_check
      _
    $region39: #{stochastic_actor_forward.1} parent=1 // pred_check_branch
      %74 = sbr.rel (0) target = $region41
    $region40: #{stochastic_actor_forward.1} parent=1 // pred_region
      %75 = dma.done [#allocation5], 512
    $region41: #{stochastic_actor_forward.1} parent=1 // pred_fallthru
      _
    // Predicated region
    $region42: #{stochastic_actor_forward.1} parent=1 // pred_check
      _
    $region43: #{stochastic_actor_forward.1} parent=1 // pred_check_branch
      %77 = sbr.rel (0) target = $region45
    $region44: #{stochastic_actor_forward.1} parent=1 // pred_region
      %78 = dma.done [#allocation8], 512
    $region45: #{stochastic_actor_forward.1} parent=1 // pred_fallthru
      _
    %v79 = vld [vmem:[#allocation2] sm:$0x3]
    %v80 = vld [vmem:[#allocation4] sm:$0xff]
    %v81 = vld [vmem:[#allocation4 + $0x8] sm:$0xff]
    %v82 = vld [vmem:[%s2] sm:$0x1]
    %v84 = vlaneseq
    %v85 = vshrl.u32 %v84, 7
    %v86 = vsub.s32 0, %v85
    %v87 = vrot.slane %v82, %v86
    %vm89 = vcmask 130048
    %v91 = vsel %vm89, %v79, 0
    %93 = vmatprep.subr.mxu0 0.0
    %94 = vmatpush1.msra.mxu0 0.0
    %95 = vmatprep.subr.mxu0 0.0
    %96 = vmatpush1.msra.mxu0 0.0
    %97 = vmatprep.subr.mxu0 0.0
    %98 = vmatpush1.msra.mxu0 0.0
    %99 = vmatprep.subr.mxu0 0.0
    %100 = vmatpush1.msra.mxu0 0.0
    %101 = vmatprep.subr.mxu0 0.0
    %102 = vmatpush1.msra.mxu0 0.0
    %103 = vmatprep.subr.mxu0 0.0
    %104 = vmatpush1.msra.mxu0 0.0
    %105 = vmatprep.subr.mxu0 0.0
    %106 = vmatpush1.msra.mxu0 0.0
    %107 = vmatprep.subr.mxu0 0.0
    %108 = vmatpush1.msra.mxu0 0.0
    %109 = vmatprep.subr.mxu0 0.0
    %110 = vmatpush1.msra.mxu0 0.0
    %111 = vmatprep.subr.mxu0 0.0
    %112 = vmatpush1.msra.mxu0 0.0
    %113 = vmatprep.subr.mxu0 0.0
    %114 = vmatpush1.msra.mxu0 0.0
    %115 = vmatprep.subr.mxu0 0.0
    %116 = vmatpush1.msra.mxu0 0.0
    %117 = vmatprep.subr.mxu0 0.0
    %118 = vmatpush1.msra.mxu0 0.0
    %119 = vmatprep.subr.mxu0 0.0
    %120 = vmatpush1.msra.mxu0 0.0
    %121 = vmatprep.subr.mxu0 0.0
    %122 = vmatpush1.msra.mxu0 %v81
    %123 = vmatprep.subr.mxu0 0.0
    %124 = vmatpush1.msra.mxu0 %v80
    %125 = vmatprep.subr.mxu0 0.0
    %126 = vmatpush2.msra.mxu0 0.0
    %127 = vmatprep.subr.mxu0 0.0
    %128 = vmatpush2.msra.mxu0 0.0
    %129 = vmatprep.subr.mxu0 0.0
    %130 = vmatpush2.msra.mxu0 0.0
    %131 = vmatprep.subr.mxu0 0.0
    %132 = vmatpush2.msra.mxu0 0.0
    %133 = vmatprep.subr.mxu0 0.0
    %134 = vmatpush2.msra.mxu0 0.0
    %135 = vmatprep.subr.mxu0 0.0
    %136 = vmatpush2.msra.mxu0 0.0
    %137 = vmatprep.subr.mxu0 0.0
    %138 = vmatpush2.msra.mxu0 0.0
    %139 = vmatprep.subr.mxu0 0.0
    %140 = vmatpush2.msra.mxu0 0.0
    %141 = vmatprep.subr.mxu0 0.0
    %142 = vmatpush2.msra.mxu0 0.0
    %143 = vmatprep.subr.mxu0 0.0
    %144 = vmatpush2.msra.mxu0 0.0
    %145 = vmatprep.subr.mxu0 0.0
    %146 = vmatpush2.msra.mxu0 0.0
    %147 = vmatprep.subr.mxu0 0.0
    %148 = vmatpush2.msra.mxu0 0.0
    %149 = vmatprep.subr.mxu0 0.0
    %150 = vmatpush2.msra.mxu0 0.0
    %151 = vmatprep.subr.mxu0 0.0
    %152 = vmatpush2.msra.mxu0 0.0
    %153 = vmatprep.subr.mxu0 0.0
    %154 = vmatpush2.msra.mxu0 0.0
    %155 = vmatprep.subr.mxu0 0.0
    %156 = vmatpush2.msra.mxu0 0.0
    %157 = vmatprep.mubr.f32.mxu0 0.0
    %158 = vmatmul.mubr.f32.gmra.mxu0 %v91
    %v159 = vpop.f32.mrf.mxu0
    %v160 = vadd.f32 %v87, %v159
    %v161 = vpop.f32.mrf.mxu0
    %162 = vdwg.mxu0
    %v163 = vmax.f32 %v160, 0.0
    %v164 = vld [vmem:[#allocation6] sm:$0xff]
    %v165 = vld [vmem:[#allocation6 + $0x8] sm:$0xff]
    %v166 = vld [vmem:[#allocation6 + $0x10] sm:$0xff]
    %v167 = vld [vmem:[#allocation6 + $0x18] sm:$0xff]
    %v168 = vld [vmem:[%s4] sm:$0x1]
    %v170 = vlaneseq
    %v171 = vshrl.u32 %v170, 7
    %v172 = vsub.s32 0, %v171
    %v173 = vrot.slane %v168, %v172
    %vm175 = vcmask 261120
    %v177 = vsel %vm175, %v163, 0
    %179 = vmatprep.subr.mxu0 0.0
    %180 = vmatpush1.msra.mxu0 0.0
    %181 = vmatprep.subr.mxu0 0.0
    %182 = vmatpush1.msra.mxu0 0.0
    %183 = vmatprep.subr.mxu0 0.0
    %184 = vmatpush1.msra.mxu0 0.0
    %185 = vmatprep.subr.mxu0 0.0
    %186 = vmatpush1.msra.mxu0 0.0
    %187 = vmatprep.subr.mxu0 0.0
    %188 = vmatpush1.msra.mxu0 0.0
    %189 = vmatprep.subr.mxu0 0.0
    %190 = vmatpush1.msra.mxu0 0.0
    %191 = vmatprep.subr.mxu0 0.0
    %192 = vmatpush1.msra.mxu0 0.0
    %193 = vmatprep.subr.mxu0 0.0
    %194 = vmatpush1.msra.mxu0 0.0
    %195 = vmatprep.subr.mxu0 0.0
    %196 = vmatpush1.msra.mxu0 0.0
    %197 = vmatprep.subr.mxu0 0.0
    %198 = vmatpush1.msra.mxu0 0.0
    %199 = vmatprep.subr.mxu0 0.0
    %200 = vmatpush1.msra.mxu0 0.0
    %201 = vmatprep.subr.mxu0 0.0
    %202 = vmatpush1.msra.mxu0 0.0
    %203 = vmatprep.subr.mxu0 0.0
    %204 = vmatpush1.msra.mxu0 %v167
    %205 = vmatprep.subr.mxu0 0.0
    %206 = vmatpush1.msra.mxu0 %v166
    %207 = vmatprep.subr.mxu0 0.0
    %208 = vmatpush1.msra.mxu0 %v165
    %209 = vmatprep.subr.mxu0 0.0
    %210 = vmatpush1.msra.mxu0 %v164
    %211 = vmatprep.subr.mxu0 0.0
    %212 = vmatpush2.msra.mxu0 0.0
    %213 = vmatprep.subr.mxu0 0.0
    %214 = vmatpush2.msra.mxu0 0.0
    %215 = vmatprep.subr.mxu0 0.0
    %216 = vmatpush2.msra.mxu0 0.0
    %217 = vmatprep.subr.mxu0 0.0
    %218 = vmatpush2.msra.mxu0 0.0
    %219 = vmatprep.subr.mxu0 0.0
    %220 = vmatpush2.msra.mxu0 0.0
    %221 = vmatprep.subr.mxu0 0.0
    %222 = vmatpush2.msra.mxu0 0.0
    %223 = vmatprep.subr.mxu0 0.0
    %224 = vmatpush2.msra.mxu0 0.0
    %225 = vmatprep.subr.mxu0 0.0
    %226 = vmatpush2.msra.mxu0 0.0
    %227 = vmatprep.subr.mxu0 0.0
    %228 = vmatpush2.msra.mxu0 0.0
    %229 = vmatprep.subr.mxu0 0.0
    %230 = vmatpush2.msra.mxu0 0.0
    %231 = vmatprep.subr.mxu0 0.0
    %232 = vmatpush2.msra.mxu0 0.0
    %233 = vmatprep.subr.mxu0 0.0
    %234 = vmatpush2.msra.mxu0 0.0
    %235 = vmatprep.subr.mxu0 0.0
    %236 = vmatpush2.msra.mxu0 0.0
    %237 = vmatprep.subr.mxu0 0.0
    %238 = vmatpush2.msra.mxu0 0.0
    %239 = vmatprep.subr.mxu0 0.0
    %240 = vmatpush2.msra.mxu0 0.0
    %241 = vmatprep.subr.mxu0 0.0
    %242 = vmatpush2.msra.mxu0 0.0
    %243 = vmatprep.mubr.f32.mxu0 0.0
    %244 = vmatmul.mubr.f32.gmra.mxu0 %v177
    %v245 = vpop.f32.mrf.mxu0
    %v246 = vadd.f32 %v173, %v245
    %v247 = vpop.f32.mrf.mxu0
    %248 = vdwg.mxu0
    %v249 = vmax.f32 %v246, 0.0
    %v250 = vld [vmem:[#allocation7] sm:$0xff]
    %v251 = vld [vmem:[#allocation7 + $0x8] sm:$0xff]
    %v252 = vld [vmem:[#allocation7 + $0x10] sm:$0xff]
    %v253 = vld [vmem:[#allocation7 + $0x18] sm:$0xff]
    %v254 = vld [vmem:[%s6] sm:$0x1]
    %v256 = vlaneseq
    %v257 = vshrl.u32 %v256, 7
    %v258 = vsub.s32 0, %v257
    %v259 = vrot.slane %v254, %v258
    %v262 = vsel %vm175, %v249, 0
    %264 = vmatprep.subr.mxu0 0.0
    %265 = vmatpush1.msra.mxu0 0.0
    %266 = vmatprep.subr.mxu0 0.0
    %267 = vmatpush1.msra.mxu0 0.0
    %268 = vmatprep.subr.mxu0 0.0
    %269 = vmatpush1.msra.mxu0 0.0
    %270 = vmatprep.subr.mxu0 0.0
    %271 = vmatpush1.msra.mxu0 0.0
    %272 = vmatprep.subr.mxu0 0.0
    %273 = vmatpush1.msra.mxu0 0.0
    %274 = vmatprep.subr.mxu0 0.0
    %275 = vmatpush1.msra.mxu0 0.0
    %276 = vmatprep.subr.mxu0 0.0
    %277 = vmatpush1.msra.mxu0 0.0
    %278 = vmatprep.subr.mxu0 0.0
    %279 = vmatpush1.msra.mxu0 0.0
    %280 = vmatprep.subr.mxu0 0.0
    %281 = vmatpush1.msra.mxu0 0.0
    %282 = vmatprep.subr.mxu0 0.0
    %283 = vmatpush1.msra.mxu0 0.0
    %284 = vmatprep.subr.mxu0 0.0
    %285 = vmatpush1.msra.mxu0 0.0
    %286 = vmatprep.subr.mxu0 0.0
    %287 = vmatpush1.msra.mxu0 0.0
    %288 = vmatprep.subr.mxu0 0.0
    %289 = vmatpush1.msra.mxu0 %v253
    %290 = vmatprep.subr.mxu0 0.0
    %291 = vmatpush1.msra.mxu0 %v252
    %292 = vmatprep.subr.mxu0 0.0
    %293 = vmatpush1.msra.mxu0 %v251
    %294 = vmatprep.subr.mxu0 0.0
    %295 = vmatpush1.msra.mxu0 %v250
    %296 = vmatprep.subr.mxu0 0.0
    %297 = vmatpush2.msra.mxu0 0.0
    %298 = vmatprep.subr.mxu0 0.0
    %299 = vmatpush2.msra.mxu0 0.0
    %300 = vmatprep.subr.mxu0 0.0
    %301 = vmatpush2.msra.mxu0 0.0
    %302 = vmatprep.subr.mxu0 0.0
    %303 = vmatpush2.msra.mxu0 0.0
    %304 = vmatprep.subr.mxu0 0.0
    %305 = vmatpush2.msra.mxu0 0.0
    %306 = vmatprep.subr.mxu0 0.0
    %307 = vmatpush2.msra.mxu0 0.0
    %308 = vmatprep.subr.mxu0 0.0
    %309 = vmatpush2.msra.mxu0 0.0
    %310 = vmatprep.subr.mxu0 0.0
    %311 = vmatpush2.msra.mxu0 0.0
    %312 = vmatprep.subr.mxu0 0.0
    %313 = vmatpush2.msra.mxu0 0.0
    %314 = vmatprep.subr.mxu0 0.0
    %315 = vmatpush2.msra.mxu0 0.0
    %316 = vmatprep.subr.mxu0 0.0
    %317 = vmatpush2.msra.mxu0 0.0
    %318 = vmatprep.subr.mxu0 0.0
    %319 = vmatpush2.msra.mxu0 0.0
    %320 = vmatprep.subr.mxu0 0.0
    %321 = vmatpush2.msra.mxu0 0.0
    %322 = vmatprep.subr.mxu0 0.0
    %323 = vmatpush2.msra.mxu0 0.0
    %324 = vmatprep.subr.mxu0 0.0
    %325 = vmatpush2.msra.mxu0 0.0
    %326 = vmatprep.subr.mxu0 0.0
    %327 = vmatpush2.msra.mxu0 0.0
    %328 = vmatprep.mubr.f32.mxu0 0.0
    %329 = vmatmul.mubr.f32.gmra.mxu0 %v262
    %v330 = vpop.f32.mrf.mxu0
    %v331 = vadd.f32 %v259, %v330
    %v332 = vpop.f32.mrf.mxu0
    %333 = vdwg.mxu0
    %v334 = vlaneseq
    %v335 = vand.u32 %v334, 127
    %vm336 = vcmp.ge.s32.totalorder %v335, 4
    %vm337 = vcmp.lt.s32.totalorder %v335, 8
    %vm338 = vmand %vm336, %vm337
    %v339 = vmax.f32 %v331, -20.0
    %v340 = vmin.f32 %v339, 2.0
    %v341 = vsel %vm338, %v340, %v331
    %342 = vst [vmem:[%s7] sm:$0x3] %v341
    // Predicated region
    $region46: #{stochastic_actor_forward.1} parent=1 // pred_check
      _
    $region47: #{stochastic_actor_forward.1} parent=1 // pred_check_branch
      %344 = sbr.rel (0) target = $region49
    $region48: #{stochastic_actor_forward.1} parent=1 // pred_region
      _
    $region49: #{stochastic_actor_forward.1} parent=1 // pred_fallthru
      _
    // Predicated region
    $region50: #{stochastic_actor_forward.1} parent=1 // pred_check
      _
    $region51: #{stochastic_actor_forward.1} parent=1 // pred_check_branch
      %346 = sbr.rel (0) target = $region53
    $region52: #{stochastic_actor_forward.1} parent=1 // pred_region
      _
    $region53: #{stochastic_actor_forward.1} parent=1 // pred_fallthru
      _
    %347 = vsyncpa [#allocation3], 1
    %348 = vsyncpa [#allocation5], 1
    %349 = vsyncpa [#allocation8], 1

</llo_original>
